<compile_context>
chip_gen: v5e
topology: v5e:2x2
jax: 0.10.0
libtpu: 0.0.40
codegen_flags: <defaults>
</compile_context>

<pallas_src>
import jax
import jax.numpy as jnp
from jax.experimental import pallas as pl
from jax.experimental.pallas import tpu as pltpu


def _round_up(x: int, m: int) -> int:
    return ((x + m - 1) // m) * m


def bmm_broadcast_kernel(lhs_ref, rhs_ref, out_ref, acc_ref):
    # lhs_ref: [TM, TK], rhs_ref: [TK, TN], out_ref: [TM, TN], acc_ref: [TM, TN] f32
    k = pl.program_id(4)

    @pl.when(k == 0)
    def _():
        acc_ref[...] = jnp.zeros_like(acc_ref)

    acc_ref[...] += jnp.dot(
        lhs_ref[...], rhs_ref[...], preferred_element_type=jnp.float32
    )

    @pl.when(k == pl.num_programs(4) - 1)
    def _():
        out_ref[...] = acc_ref[...].astype(out_ref.dtype)


def matmul_broadcast_batch_dim(lhs: jax.Array, rhs: jax.Array) -> jax.Array:
    """torch.matmul(lhs[G,B,M,K], rhs[B,K,N]) -> [G,B,M,N] (rhs broadcast over G)."""
    G, B, M, K = lhs.shape
    B2, K2, N = rhs.shape
    assert B2 == B and K2 == K, "batch/contraction dims must match"

    # Tile sizes: aligned to (8, 128) f32 tiling, capped so double-buffered
    # tiles fit comfortably in scoped VMEM on every TPU generation.
    TM = min(256, _round_up(M, 8))
    TN = min(256, _round_up(N, 128))
    TK = min(512, _round_up(K, 128))

    Mp = _round_up(M, TM)
    Np = _round_up(N, TN)
    Kp = _round_up(K, TK)

    lhs_p = lhs
    if (Mp, Kp) != (M, K):
        lhs_p = jnp.pad(lhs, ((0, 0), (0, 0), (0, Mp - M), (0, Kp - K)))
    rhs_p = rhs
    if (Kp, Np) != (K, N):
        rhs_p = jnp.pad(rhs, ((0, 0), (0, Kp - K), (0, Np - N)))

    grid = (G, B, Mp // TM, Np // TN, Kp // TK)

    cost = pl.CostEstimate(
        flops=2 * G * B * M * K * N,
        transcendentals=0,
        bytes_accessed=4 * (G * B * M * K + B * K * N + G * B * M * N),
    )

    out_p = pl.pallas_call(
        bmm_broadcast_kernel,
        out_shape=jax.ShapeDtypeStruct((G, B, Mp, Np), lhs.dtype),
        grid_spec=pltpu.PrefetchScalarGridSpec(
            num_scalar_prefetch=0,
            grid=grid,
            in_specs=[
                # lhs tile: depends on (g, b, i, k); leading batch dims squeezed.
                pl.BlockSpec((None, None, TM, TK), lambda g, b, i, j, k: (g, b, i, k)),
                # rhs tile: broadcast over g (index_map ignores g) -> stays resident.
                pl.BlockSpec((None, TK, TN), lambda g, b, i, j, k: (b, k, j)),
            ],
            out_specs=pl.BlockSpec(
                (None, None, TM, TN), lambda g, b, i, j, k: (g, b, i, j)
            ),
            scratch_shapes=[pltpu.VMEM((TM, TN), jnp.float32)],
        ),
        compiler_params=pltpu.CompilerParams(
            dimension_semantics=(
                "parallel", "parallel", "parallel", "parallel", "arbitrary",
            ),
        ),
        cost_estimate=cost,
    )(lhs_p, rhs_p)

    return out_p[:, :, :M, :N]


if __name__ == "__main__":
    key = jax.random.PRNGKey(0)
    k_lhs, k_rhs = jax.random.split(key)

    # Small shapes consistent with the module signature ([4,-1,-1,-1], [-1,-1,-1]);
    # intentionally ragged to exercise the padding / tiling path.
    G, B, M, K, N = 4, 5, 6, 7, 6
    lhs = jax.random.normal(k_lhs, (G, B, M, K), dtype=jnp.float32)
    rhs = jax.random.normal(k_rhs, (B, K, N), dtype=jnp.float32)

    out = matmul_broadcast_batch_dim(lhs, rhs)
    jax.block_until_ready(out)

    ref = jnp.matmul(lhs, rhs)  # same broadcast semantics as torch.matmul
    assert out.shape == (G, B, M, N)
    assert jnp.allclose(out, ref, atol=1e-4, rtol=1e-4)
    print("KERNEL_OK")
</pallas_src>

<mosaic_0001>
module attributes {stable_mosaic.version = 11 : i64} {
  func.func @bmm_broadcast_kernel(%arg0: i32, %arg1: i32, %arg2: i32, %arg3: i32, %arg4: i32, %arg5: memref<1x1x8x128xf32, #tpu.memory_space<vmem>>, %arg6: memref<1x128x128xf32, #tpu.memory_space<vmem>>, %arg7: memref<1x1x8x128xf32, #tpu.memory_space<vmem>>, %arg8: memref<8x128xf32, #tpu.memory_space<vmem>>) attributes {dimension_semantics = [#tpu.dimension_semantics<parallel>, #tpu.dimension_semantics<parallel>, #tpu.dimension_semantics<parallel>, #tpu.dimension_semantics<parallel>, #tpu.dimension_semantics<arbitrary>], iteration_bounds = array<i64: 4, 5, 1, 1, 1>, scalar_prefetch = 0 : i64, scratch_operands = 1 : i64, tpu.core_type = #tpu.core_type<tc>, window_params = [{transform_indices = @transform_0, window_bounds = array<i64: 1, 1, 8, 128>}, {transform_indices = @transform_1, window_bounds = array<i64: 1, 128, 128>}, {transform_indices = @transform_2, window_bounds = array<i64: 1, 1, 8, 128>}]} {
    %c0_i32 = arith.constant 0 : i32
    %0 = arith.cmpi eq, %arg4, %c0_i32 : i32
    %1 = arith.extui %0 : i1 to i32
    %c0_i32_0 = arith.constant 0 : i32
    %2 = arith.cmpi ne, %1, %c0_i32_0 : i32
    scf.if %2 {
      %cst_13 = arith.constant 0.000000e+00 : f32
      %14 = vector.broadcast %cst_13 : f32 to vector<8x128xf32>
      %c0_14 = arith.constant 0 : index
      %c0_15 = arith.constant 0 : index
      %15 = vector.load %arg8[%c0_14, %c0_15] : memref<8x128xf32, #tpu.memory_space<vmem>>, vector<8x128xf32>
      tpu.vector_store %arg8[%c0_14, %c0_15], %14 {strides = array<i32>} : memref<8x128xf32, #tpu.memory_space<vmem>>, vector<8x128xf32>,
    } else {
    }
    %c0 = arith.constant 0 : index
    %c0_1 = arith.constant 0 : index
    %3 = vector.load %arg8[%c0, %c0_1] : memref<8x128xf32, #tpu.memory_space<vmem>>, vector<8x128xf32>
    %c0_2 = arith.constant 0 : index
    %c0_3 = arith.constant 0 : index
    %c0_4 = arith.constant 0 : index
    %c0_5 = arith.constant 0 : index
    %4 = vector.load %arg5[%c0_2, %c0_3, %c0_4, %c0_5] : memref<1x1x8x128xf32, #tpu.memory_space<vmem>>, vector<1x1x8x128xf32>
    %5 = vector.shape_cast %4 : vector<1x1x8x128xf32> to vector<8x128xf32>
    %c0_6 = arith.constant 0 : index
    %c0_7 = arith.constant 0 : index
    %c0_8 = arith.constant 0 : index
    %6 = vector.load %arg6[%c0_6, %c0_7, %c0_8] : memref<1x128x128xf32, #tpu.memory_space<vmem>>, vector<1x128x128xf32>
    %7 = vector.shape_cast %6 : vector<1x128x128xf32> to vector<128x128xf32>
    %cst = arith.constant dense<0.000000e+00> : vector<8x128xf32>
    %8 = tpu.matmul %5, %7, %cst {dimension_numbers = #tpu.dot_dimension_numbers<[1], [0], [0], [1], [0, 0, 1, 1], [], []>} : vector<8x128xf32>, vector<128x128xf32>, vector<8x128xf32> -> vector<8x128xf32>
    %9 = arith.addf %3, %8 : vector<8x128xf32>
    %c0_9 = arith.constant 0 : index
    %c0_10 = arith.constant 0 : index
    %10 = vector.load %arg8[%c0_9, %c0_10] : memref<8x128xf32, #tpu.memory_space<vmem>>, vector<8x128xf32>
    tpu.vector_store %arg8[%c0_9, %c0_10], %9 {strides = array<i32>} : memref<8x128xf32, #tpu.memory_space<vmem>>, vector<8x128xf32>,
    %c0_i32_11 = arith.constant 0 : i32
    %11 = arith.cmpi eq, %arg4, %c0_i32_11 : i32
    %12 = arith.extui %11 : i1 to i32
    %c0_i32_12 = arith.constant 0 : i32
    %13 = arith.cmpi ne, %12, %c0_i32_12 : i32
    scf.if %13 {
      %c0_13 = arith.constant 0 : index
      %c0_14 = arith.constant 0 : index
      %14 = vector.load %arg8[%c0_13, %c0_14] : memref<8x128xf32, #tpu.memory_space<vmem>>, vector<8x128xf32>
      %c0_15 = arith.constant 0 : index
      %c0_16 = arith.constant 0 : index
      %c0_17 = arith.constant 0 : index
      %c0_18 = arith.constant 0 : index
      %15 = vector.load %arg7[%c0_15, %c0_16, %c0_17, %c0_18] : memref<1x1x8x128xf32, #tpu.memory_space<vmem>>, vector<1x1x8x128xf32>
      %16 = vector.shape_cast %15 : vector<1x1x8x128xf32> to vector<8x128xf32>
      %17 = vector.shape_cast %14 : vector<8x128xf32> to vector<1x1x8x128xf32>
      tpu.vector_store %arg7[%c0_15, %c0_16, %c0_17, %c0_18], %17 {strides = array<i32>} : memref<1x1x8x128xf32, #tpu.memory_space<vmem>>, vector<1x1x8x128xf32>,
    } else {
    }
    return
  }
  func.func @transform_0(%arg0: i32, %arg1: i32, %arg2: i32, %arg3: i32, %arg4: i32) -> (i32, i32, i32, i32) {
    %c0_i32 = arith.constant 0 : i32
    return %arg0, %arg1, %arg2, %arg4 : i32, i32, i32, i32
  }
  func.func @transform_1(%arg0: i32, %arg1: i32, %arg2: i32, %arg3: i32, %arg4: i32) -> (i32, i32, i32) {
    %c0_i32 = arith.constant 0 : i32
    return %arg1, %arg4, %arg3 : i32, i32, i32
  }
  func.func @transform_2(%arg0: i32, %arg1: i32, %arg2: i32, %arg3: i32, %arg4: i32) -> (i32, i32, i32, i32) {
    %c0_i32 = arith.constant 0 : i32
    return %arg0, %arg1, %arg2, %arg3 : i32, i32, i32, i32
  }
}

</mosaic_0001>

<llo_original>
// kernel: tpu_custom_call.1
$region0: #{tpu_custom_call.1}
  #allocation0 [shape = 'u32[]', space=smem, size = 0x4, offset = 0x4, fixed_abs, tag = 'smem constant byte address 0x4 - core index']
  #allocation1 [shape = 'u32[72,128]{1,0:T(1,128)}', space=vmem, size = 0x9000, scoped, tag = 'internal scratch']
  #allocation2 [shape = 'f32[8,128]{1,0:T(8,128)}', space=vmem, size = 0x1000, scoped, tag = 'scratch operand']
  %s0 = inlined_call_operand.hbm [shape: f32[4,5,8,128], index: 0, kind: input, shape index: {}]
  %s1 = inlined_call_operand.hbm [shape: f32[5,128,128], index: 1, kind: input, shape index: {}]
  %s2 = inlined_call_operand.hbm [shape: f32[4,5,8,128], index: 2, kind: output, shape index: {}]
  %s3 = sld [smem:[#allocation0]]
  $region57: #{tpu_custom_call.1} parent=0
    _
  %s5 = ssub.s32 1, %s3
  %s6 = scalar_select 0, %s5, %s3
  $region1: #{tpu_custom_call.1} parent=0
    #allocation3 [shape = 'u8[8192]{0}', space=vmem, size = 0x2000, scoped, tag = 'input window, operand 0']
    #allocation4 [shape = 's32[2]{0}', space=sflag, size = 0x8, scoped, tag = 'scoped memory for tpu_custom_call.1']
    #allocation5 [shape = 's32[2]{0}', space=sflag, size = 0x8, scoped, tag = 'scoped memory for tpu_custom_call.1']
    #allocation6 [shape = 'u8[131072]{0}', space=vmem, size = 0x20000, scoped, tag = 'input window, operand 1']
    #allocation7 [shape = 's32[2]{0}', space=sflag, size = 0x8, scoped, tag = 'scoped memory for tpu_custom_call.1']
    #allocation8 [shape = 'u8[8192]{0}', space=vmem, size = 0x2000, scoped, tag = 'output window, operand 0']
    %7 = vsyncpa [#allocation4], 0
    %s8 = scalar_lea.sflag [#allocation4], 1
    %9 = vsyncpa %s8, 0
    %10 = vsyncpa [#allocation7], 0
    %s11 = scalar_lea.sflag [#allocation7], 1
    %12 = vsyncpa %s11, 0
    %13 = vsyncpa [#allocation5], 0
    %s14 = scalar_lea.sflag [#allocation5], 1
    %15 = vsyncpa %s14, 0
    loop: start=0, step=1, limit=22
    $region2: #{tpu_custom_call.1} parent=1 // loop_pre_header
      _
    $region3: #{tpu_custom_call.1} parent=1 // loop_header
      %s17 = sphi 0, %s21
      %p18 = scmp.ge.s32.totalorder %s17, 22
      %s24 = sphi 0, %s57
      %s25 = sphi 0, %s53
      %s26 = sphi 0, %s49
      %s27 = sphi 0, %s45
      %s28 = sphi 0, %s41
      %s29 = sphi 0, %s24
      %s30 = sphi 0, %s25
      %s31 = sphi 0, %s26
      %s32 = sphi 0, %s27
      %s33 = sphi 0, %s28
      %s34 = sphi 0, %s29
      %s35 = sphi 0, %s30
      %s36 = sphi 0, %s31
      %s37 = sphi 0, %s32
      %s38 = sphi 0, %s33
      %s66 = sphi 0, %s68
      %s69 = sphi 0, %s66
      %s70 = sphi 0, %s69
      %s86 = sphi 0, %s70
      %s96 = sphi 0, %s98
      %s99 = sphi 0, %s96
      %s100 = sphi 0, %s99
      %s116 = sphi 0, %s100
      %s128 = sphi 0, %s130
      %s131 = sphi 0, %s128
      %s132 = sphi 0, %s131
      %s148 = sphi 0, %s132
    $region4: #{tpu_custom_call.1} parent=1 // loop_header_branch
      %20 = sbr.rel (%p18) target = $region8
    $region5: #{tpu_custom_call.1} parent=1 // loop_body
      %s22 = ssub.s32 %s17, 1
      %s23 = ssub.s32 %s17, 2
      %s39 = sadd.s32 1, %s28
      %p40 = scmp.ge.s32.totalorder %s39, 1
      %s41 = scalar_select %p40, 0, %s39
      %s42 = sadd.s32 1, %s27
      %s43 = scalar_select %p40, %s42, %s27
      %p44 = scmp.ge.s32.totalorder %s43, 1
      %s45 = scalar_select %p44, 0, %s43
      %s46 = sadd.s32 1, %s26
      %s47 = scalar_select %p44, %s46, %s26
      %p48 = scmp.ge.s32.totalorder %s47, 1
      %s49 = scalar_select %p48, 0, %s47
      %s50 = sadd.s32 1, %s25
      %s51 = scalar_select %p48, %s50, %s25
      %p52 = scmp.ge.s32.totalorder %s51, 5
      %s53 = scalar_select %p52, 0, %s51
      %s54 = sadd.s32 1, %s24
      %s55 = scalar_select %p52, %s54, %s24
      %p56 = scmp.ge.s32.totalorder %s55, 4
      %s57 = scalar_select %p56, 0, %s55
      %s58 = ssub.s32 %s24, %s57
      %s59 = ssub.s32 %s25, %s53
      %s60 = sor.u32 %s58, %s59
      %s61 = ssub.s32 %s26, %s49
      %s62 = sor.u32 %s60, %s61
      %s63 = ssub.s32 %s28, %s41
      %s64 = sor.u32 %s62, %s63
      %p65 = scmp.eq.s32.totalorder %s64, 0
      %s67 = sadd.s32 %s66, 1
      %s68 = scalar_select %p65, %s66, %s67
      %p71 = pneg %p65
      %p72 = scmp.eq.s32.totalorder %s17, 19
      %p73 = por %p71, %p72
      %p74 = scmp.ne.s32.totalorder %s66, %s69
      %p75 = scmp.eq.s32.totalorder %s17, 0
      %p76 = por %p74, %p75
      %p77 = scmp.ne.s32.totalorder %s66, %s69
      %p78 = scmp.eq.s32.totalorder %s22, 19
      %p79 = por %p77, %p78
      %p80 = scmp.ne.s32.totalorder %s69, %s70
      %p81 = scmp.eq.s32.totalorder %s22, 0
      %p82 = por %p80, %p81
      %p83 = scmp.ne.s32.totalorder %s69, %s70
      %p84 = scmp.eq.s32.totalorder %s23, 19
      %p85 = por %p83, %p84
      %p87 = scmp.ne.s32.totalorder %s70, %s86
      %p88 = scmp.eq.s32.totalorder %s23, 0
      %p89 = por %p87, %p88
      %s90 = ssub.s32 %s25, %s53
      %s91 = ssub.s32 %s28, %s41
      %s92 = sor.u32 %s90, %s91
      %s93 = ssub.s32 %s27, %s45
      %s94 = sor.u32 %s92, %s93
      %p95 = scmp.eq.s32.totalorder %s94, 0
      %s97 = sadd.s32 %s96, 1
      %s98 = scalar_select %p95, %s96, %s97
      %p101 = pneg %p95
      %p102 = scmp.eq.s32.totalorder %s17, 19
      %p103 = por %p101, %p102
      %p104 = scmp.ne.s32.totalorder %s96, %s99
      %p105 = scmp.eq.s32.totalorder %s17, 0
      %p106 = por %p104, %p105
      %p107 = scmp.ne.s32.totalorder %s96, %s99
      %p108 = scmp.eq.s32.totalorder %s22, 19
      %p109 = por %p107, %p108
      %p110 = scmp.ne.s32.totalorder %s99, %s100
      %p111 = scmp.eq.s32.totalorder %s22, 0
      %p112 = por %p110, %p111
      %p113 = scmp.ne.s32.totalorder %s99, %s100
      %p114 = scmp.eq.s32.totalorder %s23, 19
      %p115 = por %p113, %p114
      %p117 = scmp.ne.s32.totalorder %s100, %s116
      %p118 = scmp.eq.s32.totalorder %s23, 0
      %p119 = por %p117, %p118
      %s120 = ssub.s32 %s24, %s57
      %s121 = ssub.s32 %s25, %s53
      %s122 = sor.u32 %s120, %s121
      %s123 = ssub.s32 %s26, %s49
      %s124 = sor.u32 %s122, %s123
      %s125 = ssub.s32 %s27, %s45
      %s126 = sor.u32 %s124, %s125
      %p127 = scmp.eq.s32.totalorder %s126, 0
      %s129 = sadd.s32 %s128, 1
      %s130 = scalar_select %p127, %s128, %s129
      %p133 = pneg %p127
      %p134 = scmp.eq.s32.totalorder %s17, 19
      %p135 = por %p133, %p134
      %p136 = scmp.ne.s32.totalorder %s128, %s131
      %p137 = scmp.eq.s32.totalorder %s17, 0
      %p138 = por %p136, %p137
      %p139 = scmp.ne.s32.totalorder %s128, %s131
      %p140 = scmp.eq.s32.totalorder %s22, 19
      %p141 = por %p139, %p140
      %p142 = scmp.ne.s32.totalorder %s131, %s132
      %p143 = scmp.eq.s32.totalorder %s22, 0
      %p144 = por %p142, %p143
      %p145 = scmp.ne.s32.totalorder %s131, %s132
      %p146 = scmp.eq.s32.totalorder %s23, 19
      %p147 = por %p145, %p146
      %p149 = scmp.ne.s32.totalorder %s132, %s148
      %p150 = scmp.eq.s32.totalorder %s23, 0
      %p151 = por %p149, %p150
      %p152 = scmp.le.s32.totalorder 1, %s17
      %p153 = scmp.lt.s32.totalorder %s17, 21
      %p154 = pnand %p152, %p153
      %p155 = pneg %p154
      // Predicated region
      $region9: #{tpu_custom_call.1} parent=5 // pred_check
        _
      $region10: #{tpu_custom_call.1} parent=5 // pred_check_branch
        %157 = sbr.rel (%p154) target = $region12
      $region11: #{tpu_custom_call.1} parent=5 // pred_region
        %s158 = ssub.s32 %s17, 1
      $region12: #{tpu_custom_call.1} parent=5 // pred_fallthru
        _
      %p159 = scmp.lt.s32.totalorder %s17, 20
      // Predicated region
      $region13: #{tpu_custom_call.1} parent=5 // pred_check
        %p160 = pneg %p159
      $region14: #{tpu_custom_call.1} parent=5 // pred_check_branch
        %162 = sbr.rel (%p160) target = $region16
      $region15: #{tpu_custom_call.1} parent=5 // pred_region
        // Predicated region
        $region17: #{tpu_custom_call.1} parent=15 // pred_check
          %p163 = pneg %p76
        $region18: #{tpu_custom_call.1} parent=15 // pred_check_branch
          %165 = sbr.rel (%p163) target = $region20
        $region19: #{tpu_custom_call.1} parent=15 // pred_region
          %s166 = sand.u32 %s66, 1
          %s167 = scalar_lea.sflag [#allocation4], %s166
          %s168 = sand.u32 %s66, 1
          %s169 = smul.addr %s168, 8
          %s170 = scalar_lea.vmem [#allocation3], %s169
          %172 = vsyncadd %s167, 0
          %s173 = sadd.s32 %s28, %s26
          %s174 = sadd.s32 %s173, %s25
          %s175 = smul.addr %s24, 5
          %s176 = sadd.s32 %s174, %s175
          %s177 = smul.addr %s176, 8
          %s178 = scalar_lea.hbm %s0, %s177
          %s180 = sshll.u32 %s178, 4
          %s181 = int_to_ptr.hbm [resolvable:$true] %s180
          %s182 = sshll.u32 %s170, 4
          %s183 = int_to_ptr.vmem [resolvable:$true] %s182
          %185 = dma.hbm_to_vmem [thread:$0]  %s181, 128, %s183, %s167
        $region20: #{tpu_custom_call.1} parent=15 // pred_fallthru
          _
        // Predicated region
        $region21: #{tpu_custom_call.1} parent=15 // pred_check
          %p186 = pneg %p106
        $region22: #{tpu_custom_call.1} parent=15 // pred_check_branch
          %188 = sbr.rel (%p186) target = $region24
        $region23: #{tpu_custom_call.1} parent=15 // pred_region
          %s189 = sand.u32 %s96, 1
          %s190 = scalar_lea.sflag [#allocation7], %s189
          %s191 = sand.u32 %s96, 1
          %s192 = smul.addr %s191, 128
          %s193 = scalar_lea.vmem [#allocation6], %s192
          %s194 = smul.u32 16, %s28
          %196 = vsyncadd %s190, 0
          %s197 = sadd.s32 %s27, %s194
          %s198 = smul.addr %s25, 16
          %s199 = sadd.s32 %s197, %s198
          %s200 = smul.addr %s199, 8
          %s201 = scalar_lea.hbm %s1, %s200
          %s202 = sshll.u32 %s201, 4
          %s203 = int_to_ptr.hbm [resolvable:$true] %s202
          %s204 = sshll.u32 %s193, 4
          %s205 = int_to_ptr.vmem [resolvable:$true] %s204
          %210 = dma.hbm_to_vmem [thread:$0]  %s203, 2048, %s205, %s190, 128, 128, 8
        $region24: #{tpu_custom_call.1} parent=15 // pred_fallthru
          _
      $region16: #{tpu_custom_call.1} parent=5 // pred_fallthru
        _
      %p211 = scmp.le.s32.totalorder 1, %s17
      %p212 = scmp.lt.s32.totalorder %s17, 21
      %p213 = pnand %p211, %p212
      %p214 = pneg %p213
      // Predicated region
      $region25: #{tpu_custom_call.1} parent=5 // pred_check
        _
      $region26: #{tpu_custom_call.1} parent=5 // pred_check_branch
        %216 = sbr.rel (%p213) target = $region28
      $region27: #{tpu_custom_call.1} parent=5 // pred_region
        %s217 = ssub.s32 %s17, 1
        %s218 = sand.u32 %s69, 1
        %s219 = scalar_lea.sflag [#allocation4], %s218
        %s220 = sand.u32 %s69, 1
        %s221 = smul.addr %s220, 8
        %s222 = scalar_lea.vmem [#allocation3], %s221
        // Predicated region
        $region29: #{tpu_custom_call.1} parent=27 // pred_check
          %p223 = pneg %p82
        $region30: #{tpu_custom_call.1} parent=27 // pred_check_branch
          %225 = sbr.rel (%p223) target = $region32
        $region31: #{tpu_custom_call.1} parent=27 // pred_region
          %227 = dma.done %s219, 128
        $region32: #{tpu_custom_call.1} parent=27 // pred_fallthru
          _
        %s228 = sand.u32 %s99, 1
        %s229 = scalar_lea.sflag [#allocation7], %s228
        %s230 = sand.u32 %s99, 1
        %s231 = smul.addr %s230, 128
        %s232 = scalar_lea.vmem [#allocation6], %s231
        // Predicated region
        $region33: #{tpu_custom_call.1} parent=27 // pred_check
          %p233 = pneg %p112
        $region34: #{tpu_custom_call.1} parent=27 // pred_check_branch
          %235 = sbr.rel (%p233) target = $region36
        $region35: #{tpu_custom_call.1} parent=27 // pred_region
          %237 = dma.done %s229, 2048
        $region36: #{tpu_custom_call.1} parent=27 // pred_fallthru
          _
        %s238 = sand.u32 %s69, 1
        %s239 = scalar_lea.sflag [#allocation4], %s238
        %s240 = sand.u32 %s69, 1
        %s241 = smul.addr %s240, 8
        %s242 = scalar_lea.vmem [#allocation3], %s241
        %p243 = pneg %p82
        %p244 = pneg %p79
        %s245 = sand.u32 %s99, 1
        %s246 = scalar_lea.sflag [#allocation7], %s245
        %s247 = sand.u32 %s99, 1
        %s248 = smul.addr %s247, 128
        %s249 = scalar_lea.vmem [#allocation6], %s248
        %p250 = pneg %p112
        %p251 = pneg %p109
        %p252 = pneg %p144
        %p253 = pneg %p141
        %s254 = sand.u32 %s131, 1
        %s255 = scalar_lea.sflag [#allocation5], %s254
        %s256 = sand.u32 %s131, 1
        %s257 = smul.addr %s256, 8
        %s258 = scalar_lea.vmem [#allocation8], %s257
        %s259 = smul.u32 16, %s33
        %p260 = scmp.eq.s32.totalorder %s33, 0
        // Predicated region
        $region37: #{tpu_custom_call.1} parent=27 // pred_check
          %p261 = pneg %p260
        $region38: #{tpu_custom_call.1} parent=27 // pred_check_branch
          %263 = sbr.rel (%p261) target = $region40
        $region39: #{tpu_custom_call.1} parent=27 // pred_region
          %264 = vst [vmem:[#allocation2] sm:$0xff] 0.0
        $region40: #{tpu_custom_call.1} parent=27 // pred_fallthru
          _
        %v265 = vld [vmem:[#allocation2] sm:$0xff]
        %v266 = vld [vmem:[%s222] sm:$0xff]
        %v267 = vld [vmem:[%s232] sm:$0xff]
        %v268 = vld [vmem:[%s232 + $0x8] sm:$0xff]
        %v269 = vld [vmem:[%s232 + $0x10] sm:$0xff]
        %v270 = vld [vmem:[%s232 + $0x18] sm:$0xff]
        %v271 = vld [vmem:[%s232 + $0x20] sm:$0xff]
        %v272 = vld [vmem:[%s232 + $0x28] sm:$0xff]
        %v273 = vld [vmem:[%s232 + $0x30] sm:$0xff]
        %v274 = vld [vmem:[%s232 + $0x38] sm:$0xff]
        %v275 = vld [vmem:[%s232 + $0x40] sm:$0xff]
        %v276 = vld [vmem:[%s232 + $0x48] sm:$0xff]
        %v277 = vld [vmem:[%s232 + $0x50] sm:$0xff]
        %v278 = vld [vmem:[%s232 + $0x58] sm:$0xff]
        %v279 = vld [vmem:[%s232 + $0x60] sm:$0xff]
        %v280 = vld [vmem:[%s232 + $0x68] sm:$0xff]
        %v281 = vld [vmem:[%s232 + $0x70] sm:$0xff]
        %v282 = vld [vmem:[%s232 + $0x78] sm:$0xff]
        %283 = vmatpush.msra.mxu0 %v282
        %284 = vmatpush.msra.mxu0 %v281
        %285 = vmatpush.msra.mxu0 %v280
        %286 = vmatpush.msra.mxu0 %v279
        %287 = vmatpush.msra.mxu0 %v278
        %288 = vmatpush.msra.mxu0 %v277
        %289 = vmatpush.msra.mxu0 %v276
        %290 = vmatpush.msra.mxu0 %v275
        %291 = vmatpush.msra.mxu0 %v274
        %292 = vmatpush.msra.mxu0 %v273
        %293 = vmatpush.msra.mxu0 %v272
        %294 = vmatpush.msra.mxu0 %v271
        %295 = vmatpush.msra.mxu0 %v270
        %296 = vmatpush.msra.mxu0 %v269
        %297 = vmatpush.msra.mxu0 %v268
        %298 = vmatpush.msra.mxu0 %v267
        %299 = vmatmul.f32.gmra.mxu0 %v266
        %v300 = vpop.f32.mrf.mxu0
        %v301 = vadd.f32 0.0, %v300
        %302 = vdwg.mxu0
        %v303 = vadd.f32 %v265, %v301
        %304 = vst [vmem:[#allocation2] sm:$0xff] %v303
        // Predicated region
        $region41: #{tpu_custom_call.1} parent=27 // pred_check
          %p305 = pneg %p260
        $region42: #{tpu_custom_call.1} parent=27 // pred_check_branch
          %307 = sbr.rel (%p305) target = $region44
        $region43: #{tpu_custom_call.1} parent=27 // pred_region
          %v308 = vld [vmem:[#allocation2] sm:$0xff]
          %309 = vst [vmem:[%s258] sm:$0xff] %v308
        $region44: #{tpu_custom_call.1} parent=27 // pred_fallthru
          _
        %s310 = sand.u32 %s131, 1
        %s311 = scalar_lea.sflag [#allocation5], %s310
        %s312 = sand.u32 %s131, 1
        %s313 = smul.addr %s312, 8
        %s314 = scalar_lea.vmem [#allocation8], %s313
        // Predicated region
        $region45: #{tpu_custom_call.1} parent=27 // pred_check
          %p315 = pneg %p141
        $region46: #{tpu_custom_call.1} parent=27 // pred_check_branch
          %317 = sbr.rel (%p315) target = $region48
        $region47: #{tpu_custom_call.1} parent=27 // pred_region
          %319 = vsyncadd %s311, 0
          %s320 = sadd.s32 %s32, %s31
          %s321 = sadd.s32 %s320, %s30
          %s322 = smul.addr %s29, 5
          %s323 = sadd.s32 %s321, %s322
          %s324 = smul.addr %s323, 8
          %s325 = scalar_lea.hbm %s2, %s324
          %s327 = sshll.u32 %s314, 4
          %s328 = int_to_ptr.vmem [resolvable:$true] %s327
          %s329 = sshll.u32 %s325, 4
          %s330 = int_to_ptr.hbm [resolvable:$true] %s329
          %332 = dma.vmem_to_hbm [thread:$0]  %s328, 128, %s330, %s311
        $region48: #{tpu_custom_call.1} parent=27 // pred_fallthru
          _
      $region28: #{tpu_custom_call.1} parent=5 // pred_fallthru
        _
      %p333 = scmp.le.s32.totalorder 2, %s17
      // Predicated region
      $region49: #{tpu_custom_call.1} parent=5 // pred_check
        %p334 = pneg %p333
      $region50: #{tpu_custom_call.1} parent=5 // pred_check_branch
        %336 = sbr.rel (%p334) target = $region52
      $region51: #{tpu_custom_call.1} parent=5 // pred_region
        %s337 = ssub.s32 %s17, 2
        // Predicated region
        $region53: #{tpu_custom_call.1} parent=51 // pred_check
          %p338 = pneg %p147
        $region54: #{tpu_custom_call.1} parent=51 // pred_check_branch
          %340 = sbr.rel (%p338) target = $region56
        $region55: #{tpu_custom_call.1} parent=51 // pred_region
          %s341 = sand.u32 %s132, 1
          %s342 = scalar_lea.sflag [#allocation5], %s341
          %s343 = sand.u32 %s132, 1
          %s344 = smul.addr %s343, 8
          %s345 = scalar_lea.vmem [#allocation8], %s344
          %347 = dma.done %s342, 128
        $region56: #{tpu_custom_call.1} parent=51 // pred_fallthru
          _
      $region52: #{tpu_custom_call.1} parent=5 // pred_fallthru
        _
    $region6: #{tpu_custom_call.1} parent=1 // loop_footer
      %s21 = sadd.s32 1, %s17
    $region7: #{tpu_custom_call.1} parent=1 // loop_footer_branch
      %16 = sbr.rel target = $region3
    $region8: #{tpu_custom_call.1} parent=1 // loop_exit
      _
    %348 = vsyncpa [#allocation4], 1
    %s349 = scalar_lea.sflag [#allocation4], 1
    %350 = vsyncpa %s349, 1
    %351 = vsyncpa [#allocation7], 1
    %s352 = scalar_lea.sflag [#allocation7], 1
    %353 = vsyncpa %s352, 1
    %354 = vsyncpa [#allocation5], 1
    %s355 = scalar_lea.sflag [#allocation5], 1
    %356 = vsyncpa %s355, 1

</llo_original>
